<compile_context>
chip_gen: v6e
topology: v6e:2x2x1
jax: 0.10.0
libtpu: 0.0.40
codegen_flags: <defaults>
</compile_context>

<pallas_src>
import jax
import jax.numpy as jnp
from jax.experimental import pallas as pl
from jax.experimental.pallas import tpu as pltpu

NUM_CITIES = 88
STDDEVG = 0.01
STDDEVW = 0.1

_LANE = 128          # TPU lane width: full tiles keep the last dim a multiple of this.
_SMALL_N = 256       # below this, use a single full-array block (no tiling).


def _round_up(v, m):
    return ((v + m - 1) // m) * m


def _basic_kernel(w_ref, x_ref, b_ref, o_ref):
    # Hot path: MXU matmul (f32 accumulate) + elementwise bias add, fused.
    acc = jnp.dot(w_ref[...], x_ref[...], preferred_element_type=jnp.float32)
    o_ref[...] = (acc + b_ref[...]).astype(o_ref.dtype)


def basic_module_forward(weight, x, bias, *, tile_n=4096):
    """Pallas equivalent of BasicModule.forward: weight @ x + bias.

    weight: (num_cities, num_cities) f32
    x:      (num_cities, batch)      f32
    bias:   (num_cities, batch)      f32
    returns (num_cities, batch)      f32
    """
    K, K2 = weight.shape
    assert K == K2
    Kx, N = x.shape
    assert Kx == K
    assert bias.shape == (K, N)

    if N <= _SMALL_N:
        # Tiny-batch fast path: one block covering the whole array (block last
        # dim == full array dim is allowed by the (8,128) rule). The masked
        # store on an 88xN tile is negligible here and we avoid any pad/slice.
        tn = N
    else:
        # Defensive: keep the tile lane-dense even if tile_n isn't 128-aligned.
        tile_n = max(_LANE, (tile_n // _LANE) * _LANE)
        # Keep grid >= 2 so the "parallel" batch axis shards across the two
        # TensorCores on v7x (harmless on single-TC v5e/v6e).
        tn = max(_LANE, min(tile_n, _round_up(pl.cdiv(N, 2), _LANE)))

    grid = (pl.cdiv(N, tn),)

    cost = pl.CostEstimate(
        flops=2 * K * K * N,
        bytes_accessed=4 * (3 * K * N + K * K),
        transcendentals=0,
    )

    return pl.pallas_call(
        _basic_kernel,
        out_shape=jax.ShapeDtypeStruct((K, N), jnp.float32),
        grid_spec=pl.GridSpec(
            grid=grid,
            in_specs=[
                # Weight: constant block index -> DMA'd once, resident in VMEM.
                # Single buffer is enough (no re-fetch across tiles).
                pl.BlockSpec((K, K), lambda j: (0, 0),
                             pipeline_mode=pl.Buffered(1)),
                # x / bias: streamed batch tiles, double-buffered by default.
                pl.BlockSpec((K, tn), lambda j: (0, j)),
                pl.BlockSpec((K, tn), lambda j: (0, j)),
            ],
            out_specs=pl.BlockSpec((K, tn), lambda j: (0, j)),
        ),
        compiler_params=pltpu.CompilerParams(
            dimension_semantics=("parallel",),
        ),
        cost_estimate=cost,
    )(weight, x, bias)


def init_params(key):
    kw, kw2, kb = jax.random.split(key, 3)
    # self.weight = normal_(ones(88,88), mean=2*stddevg, std=stddevg)
    weight = 2.0 * STDDEVG + STDDEVG * jax.random.normal(
        kw, (NUM_CITIES, NUM_CITIES), dtype=jnp.float32
    )
    # self.weight2 = normal_(randn(1), mean=2*stddevw, std=stddevw) (unused in forward)
    weight2 = 2.0 * STDDEVW + STDDEVW * jax.random.normal(kw2, (1,), dtype=jnp.float32)
    return weight, weight2, kb


if __name__ == "__main__":
    key = jax.random.PRNGKey(0)
    weight, weight2, kb = init_params(key)

    # 1) Small shape consistent with the module: 88 cities, batch 8 (fast path).
    batch = 8
    kx, kbias = jax.random.split(kb)
    x = jax.random.normal(kx, (NUM_CITIES, batch), dtype=jnp.float32)
    # bias in the original script is an externally loaded tensor transposed to
    # match the output shape; synthesize it deterministically here.
    bias = jax.random.normal(kbias, (NUM_CITIES, batch), dtype=jnp.float32)

    out = jax.block_until_ready(basic_module_forward(weight, x, bias))
    ref = weight @ x + bias
    assert out.shape == (NUM_CITIES, batch)
    assert jnp.allclose(out, ref, atol=1e-4, rtol=1e-4)

    # 2) Multi-tile streamed path, tile-aligned batch (grid == 2 on every gen).
    big_batch = 1024
    kx2, kb2 = jax.random.split(kx)
    x_big = jax.random.normal(kx2, (NUM_CITIES, big_batch), dtype=jnp.float32)
    bias_big = jax.random.normal(kb2, (NUM_CITIES, big_batch), dtype=jnp.float32)
    out_big = jax.block_until_ready(basic_module_forward(weight, x_big, bias_big))
    ref_big = weight @ x_big + bias_big
    assert out_big.shape == (NUM_CITIES, big_batch)
    assert jnp.allclose(out_big, ref_big, atol=1e-4, rtol=1e-4)

    # 3) Ragged batch (not a tile multiple): exercises the masked final block
    #    with no wrapper-side pad/slice.
    ragged_batch = 1000
    kx3, kb3 = jax.random.split(kx2)
    x_rag = jax.random.normal(kx3, (NUM_CITIES, ragged_batch), dtype=jnp.float32)
    bias_rag = jax.random.normal(kb3, (NUM_CITIES, ragged_batch), dtype=jnp.float32)
    out_rag = jax.block_until_ready(basic_module_forward(weight, x_rag, bias_rag))
    ref_rag = weight @ x_rag + bias_rag
    assert out_rag.shape == (NUM_CITIES, ragged_batch)
    assert jnp.allclose(out_rag, ref_rag, atol=1e-4, rtol=1e-4)

    print("KERNEL_OK")
</pallas_src>

<mosaic_0001>
module attributes {stable_mosaic.version = 11 : i64} {
  func.func @_basic_kernel(%arg0: i32, %arg1: memref<88x88xf32, #tpu.memory_space<vmem>>, %arg2: memref<88x8xf32, #tpu.memory_space<vmem>>, %arg3: memref<88x8xf32, #tpu.memory_space<vmem>>, %arg4: memref<88x8xf32, #tpu.memory_space<vmem>>) attributes {dimension_semantics = [#tpu.dimension_semantics<parallel>], iteration_bounds = array<i64: 1>, scalar_prefetch = 0 : i64, scratch_operands = 0 : i64, tpu.core_type = #tpu.core_type<tc>, window_params = [{pipeline_mode = #tpu.pipeline_mode<synchronous>, transform_indices = @transform_0, window_bounds = array<i64: 88, 88>}, {transform_indices = @transform_1, window_bounds = array<i64: 88, 8>}, {transform_indices = @transform_2, window_bounds = array<i64: 88, 8>}, {transform_indices = @transform_3, window_bounds = array<i64: 88, 8>}]} {
    %c0 = arith.constant 0 : index
    %c0_0 = arith.constant 0 : index
    %0 = vector.load %arg1[%c0, %c0_0] : memref<88x88xf32, #tpu.memory_space<vmem>>, vector<88x88xf32>
    %c0_1 = arith.constant 0 : index
    %c0_2 = arith.constant 0 : index
    %1 = vector.load %arg2[%c0_1, %c0_2] : memref<88x8xf32, #tpu.memory_space<vmem>>, vector<88x8xf32>
    %cst = arith.constant dense<0.000000e+00> : vector<88x8xf32>
    %2 = tpu.matmul %0, %1, %cst {dimension_numbers = #tpu.dot_dimension_numbers<[1], [0], [0], [1], [0, 0, 1, 1], [], []>} : vector<88x88xf32>, vector<88x8xf32>, vector<88x8xf32> -> vector<88x8xf32>
    %c0_3 = arith.constant 0 : index
    %c0_4 = arith.constant 0 : index
    %3 = vector.load %arg3[%c0_3, %c0_4] : memref<88x8xf32, #tpu.memory_space<vmem>>, vector<88x8xf32>
    %4 = arith.addf %2, %3 : vector<88x8xf32>
    %c0_5 = arith.constant 0 : index
    %c0_6 = arith.constant 0 : index
    %5 = vector.load %arg4[%c0_5, %c0_6] : memref<88x8xf32, #tpu.memory_space<vmem>>, vector<88x8xf32>
    tpu.vector_store %arg4[%c0_5, %c0_6], %4 {strides = array<i32>} : memref<88x8xf32, #tpu.memory_space<vmem>>, vector<88x8xf32>,
    return
  }
  func.func @transform_0(%arg0: i32) -> (i32, i32) {
    %c0_i32 = arith.constant 0 : i32
    %c0_i32_0 = arith.constant 0 : i32
    %c0_i32_1 = arith.constant 0 : i32
    return %c0_i32, %c0_i32_0 : i32, i32
  }
  func.func @transform_1(%arg0: i32) -> (i32, i32) {
    %c0_i32 = arith.constant 0 : i32
    %c0_i32_0 = arith.constant 0 : i32
    return %c0_i32, %arg0 : i32, i32
  }
  func.func @transform_2(%arg0: i32) -> (i32, i32) {
    %c0_i32 = arith.constant 0 : i32
    %c0_i32_0 = arith.constant 0 : i32
    return %c0_i32, %arg0 : i32, i32
  }
  func.func @transform_3(%arg0: i32) -> (i32, i32) {
    %c0_i32 = arith.constant 0 : i32
    %c0_i32_0 = arith.constant 0 : i32
    return %c0_i32, %arg0 : i32, i32
  }
}

</mosaic_0001>

<llo_original>
// kernel: tpu_custom_call.1
$region0: #{tpu_custom_call.1}
  #allocation0 [shape = 'u32[]', space=smem, size = 0x4, offset = 0x4, fixed_abs, tag = 'smem constant byte address 0x4 - core index']
  #allocation1 [shape = 'u32[144,128]{1,0:T(1,128)}', space=vmem, size = 0x12000, scoped, tag = 'internal scratch']
  %s0 = inlined_call_operand.vmem [shape: f32[88,88], index: 0, kind: input, shape index: {}]
  %s1 = inlined_call_operand.vmem [shape: f32[88,8], index: 1, kind: input, shape index: {}]
  %s2 = inlined_call_operand.vmem [shape: f32[88,8], index: 2, kind: input, shape index: {}]
  %s3 = inlined_call_operand.vmem [shape: f32[88,8], index: 3, kind: output, shape index: {}]
  %s4 = sld [smem:[#allocation0]]
  $region22: #{tpu_custom_call.1} parent=0
    _
  %s6 = ssub.s32 1, %s4
  %s7 = scalar_select 0, %s6, %s4
  // Predicated region
  $region2: #{tpu_custom_call.1} parent=0 // pred_check
    _
  $region3: #{tpu_custom_call.1} parent=0 // pred_check_branch
    %9 = sbr.rel (0) target = $region5
  $region4: #{tpu_custom_call.1} parent=0 // pred_region
    _
  $region5: #{tpu_custom_call.1} parent=0 // pred_fallthru
    _
  // Predicated region
  $region6: #{tpu_custom_call.1} parent=0 // pred_check
    _
  $region7: #{tpu_custom_call.1} parent=0 // pred_check_branch
    %11 = sbr.rel (0) target = $region9
  $region8: #{tpu_custom_call.1} parent=0 // pred_region
    _
  $region9: #{tpu_custom_call.1} parent=0 // pred_fallthru
    _
  // Predicated region
  $region10: #{tpu_custom_call.1} parent=0 // pred_check
    _
  $region11: #{tpu_custom_call.1} parent=0 // pred_check_branch
    %13 = sbr.rel (0) target = $region13
  $region12: #{tpu_custom_call.1} parent=0 // pred_region
    _
  $region13: #{tpu_custom_call.1} parent=0 // pred_fallthru
    _
  %v14 = vld [vmem:[%s0] sm:$0xff]
  %v15 = vld [vmem:[%s0 + $0x8] sm:$0xff]
  %v16 = vld [vmem:[%s0 + $0x10] sm:$0xff]
  %v17 = vld [vmem:[%s0 + $0x18] sm:$0xff]
  %v18 = vld [vmem:[%s0 + $0x20] sm:$0xff]
  %v19 = vld [vmem:[%s0 + $0x28] sm:$0xff]
  %v20 = vld [vmem:[%s0 + $0x30] sm:$0xff]
  %v21 = vld [vmem:[%s0 + $0x38] sm:$0xff]
  %v22 = vld [vmem:[%s0 + $0x40] sm:$0xff]
  %v23 = vld [vmem:[%s0 + $0x48] sm:$0xff]
  %v24 = vld [vmem:[%s0 + $0x50] sm:$0xff]
  %v25 = vld [vmem:[%s1] sm:$0xff]
  %v26 = vld [vmem:[%s1 + $0x8] sm:$0xff]
  %v27 = vld [vmem:[%s1 + $0x10] sm:$0xff]
  %v28 = vld [vmem:[%s1 + $0x18] sm:$0xff]
  %v29 = vld [vmem:[%s1 + $0x20] sm:$0xff]
  %v30 = vld [vmem:[%s1 + $0x28] sm:$0xff]
  %v31 = vld [vmem:[%s1 + $0x30] sm:$0xff]
  %v32 = vld [vmem:[%s1 + $0x38] sm:$0xff]
  %v33 = vld [vmem:[%s1 + $0x40] sm:$0xff]
  %v34 = vld [vmem:[%s1 + $0x48] sm:$0xff]
  %v35 = vld [vmem:[%s1 + $0x50] sm:$0xff]
  %v36 = vld [vmem:[%s2] sm:$0xff]
  %v37 = vld [vmem:[%s2 + $0x8] sm:$0xff]
  %v38 = vld [vmem:[%s2 + $0x10] sm:$0xff]
  %v39 = vld [vmem:[%s2 + $0x18] sm:$0xff]
  %v40 = vld [vmem:[%s2 + $0x20] sm:$0xff]
  %v41 = vld [vmem:[%s2 + $0x28] sm:$0xff]
  %v42 = vld [vmem:[%s2 + $0x30] sm:$0xff]
  %v43 = vld [vmem:[%s2 + $0x38] sm:$0xff]
  %v44 = vld [vmem:[%s2 + $0x40] sm:$0xff]
  %v45 = vld [vmem:[%s2 + $0x48] sm:$0xff]
  %v46 = vld [vmem:[%s2 + $0x50] sm:$0xff]
  %vm47 = vcmask 719872
  %v49 = vsel %vm47, %v14, 0
  %v52 = vsel %vm47, %v15, 0
  %v55 = vsel %vm47, %v16, 0
  %v58 = vsel %vm47, %v17, 0
  %v61 = vsel %vm47, %v18, 0
  %v64 = vsel %vm47, %v19, 0
  %v67 = vsel %vm47, %v20, 0
  %v70 = vsel %vm47, %v21, 0
  %v73 = vsel %vm47, %v22, 0
  %v76 = vsel %vm47, %v23, 0
  %v79 = vsel %vm47, %v24, 0
  %81 = vmatprep.subr.mxu0 0.0
  %82 = vmatpush1.msra.mxu0 0.0
  %83 = vmatprep.subr.mxu0 0.0
  %84 = vmatpush1.msra.mxu0 0.0
  %85 = vmatprep.subr.mxu0 0.0
  %86 = vmatpush1.msra.mxu0 0.0
  %87 = vmatprep.subr.mxu0 0.0
  %88 = vmatpush1.msra.mxu0 0.0
  %89 = vmatprep.subr.mxu0 0.0
  %90 = vmatpush1.msra.mxu0 0.0
  %91 = vmatprep.subr.mxu0 0.0
  %92 = vmatpush1.msra.mxu0 %v35
  %93 = vmatprep.subr.mxu0 0.0
  %94 = vmatpush1.msra.mxu0 %v34
  %95 = vmatprep.subr.mxu0 0.0
  %96 = vmatpush1.msra.mxu0 %v33
  %97 = vmatprep.subr.mxu0 0.0
  %98 = vmatpush1.msra.mxu0 %v32
  %99 = vmatprep.subr.mxu0 0.0
  %100 = vmatpush1.msra.mxu0 %v31
  %101 = vmatprep.subr.mxu0 0.0
  %102 = vmatpush1.msra.mxu0 %v30
  %103 = vmatprep.subr.mxu0 0.0
  %104 = vmatpush1.msra.mxu0 %v29
  %105 = vmatprep.subr.mxu0 0.0
  %106 = vmatpush1.msra.mxu0 %v28
  %107 = vmatprep.subr.mxu0 0.0
  %108 = vmatpush1.msra.mxu0 %v27
  %109 = vmatprep.subr.mxu0 0.0
  %110 = vmatpush1.msra.mxu0 %v26
  %111 = vmatprep.subr.mxu0 0.0
  %112 = vmatpush1.msra.mxu0 %v25
  %113 = vmatprep.subr.mxu0 0.0
  %114 = vmatpush2.msra.mxu0 0.0
  %115 = vmatprep.subr.mxu0 0.0
  %116 = vmatpush2.msra.mxu0 0.0
  %117 = vmatprep.subr.mxu0 0.0
  %118 = vmatpush2.msra.mxu0 0.0
  %119 = vmatprep.subr.mxu0 0.0
  %120 = vmatpush2.msra.mxu0 0.0
  %121 = vmatprep.subr.mxu0 0.0
  %122 = vmatpush2.msra.mxu0 0.0
  %123 = vmatprep.subr.mxu0 0.0
  %124 = vmatpush2.msra.mxu0 0.0
  %125 = vmatprep.subr.mxu0 0.0
  %126 = vmatpush2.msra.mxu0 0.0
  %127 = vmatprep.subr.mxu0 0.0
  %128 = vmatpush2.msra.mxu0 0.0
  %129 = vmatprep.subr.mxu0 0.0
  %130 = vmatpush2.msra.mxu0 0.0
  %131 = vmatprep.subr.mxu0 0.0
  %132 = vmatpush2.msra.mxu0 0.0
  %133 = vmatprep.subr.mxu0 0.0
  %134 = vmatpush2.msra.mxu0 0.0
  %135 = vmatprep.subr.mxu0 0.0
  %136 = vmatpush2.msra.mxu0 0.0
  %137 = vmatprep.subr.mxu0 0.0
  %138 = vmatpush2.msra.mxu0 0.0
  %139 = vmatprep.subr.mxu0 0.0
  %140 = vmatpush2.msra.mxu0 0.0
  %141 = vmatprep.subr.mxu0 0.0
  %142 = vmatpush2.msra.mxu0 0.0
  %143 = vmatprep.subr.mxu0 0.0
  %144 = vmatpush2.msra.mxu0 0.0
  %145 = vmatprep.mubr.f32.mxu0 0.0
  %146 = vmatmul.mubr.f32.gmra.mxu0 %v49
  %v147 = vpop.f32.mrf.mxu0
  %v148 = vadd.f32 %v36, %v147
  %v149 = vpop.f32.mrf.mxu0
  %150 = vmatprep.mubr.f32.mxu0 0.0
  %151 = vmatmul.mubr.f32.gmra.mxu0 %v52
  %v152 = vpop.f32.mrf.mxu0
  %v153 = vadd.f32 %v37, %v152
  %v154 = vpop.f32.mrf.mxu0
  %155 = vmatprep.mubr.f32.mxu0 0.0
  %156 = vmatmul.mubr.f32.gmra.mxu0 %v55
  %v157 = vpop.f32.mrf.mxu0
  %v158 = vadd.f32 %v38, %v157
  %v159 = vpop.f32.mrf.mxu0
  %160 = vmatprep.mubr.f32.mxu0 0.0
  %161 = vmatmul.mubr.f32.gmra.mxu0 %v58
  %v162 = vpop.f32.mrf.mxu0
  %v163 = vadd.f32 %v39, %v162
  %v164 = vpop.f32.mrf.mxu0
  %165 = vmatprep.mubr.f32.mxu0 0.0
  %166 = vmatmul.mubr.f32.gmra.mxu0 %v61
  %v167 = vpop.f32.mrf.mxu0
  %v168 = vadd.f32 %v40, %v167
  %v169 = vpop.f32.mrf.mxu0
  %170 = vmatprep.mubr.f32.mxu0 0.0
  %171 = vmatmul.mubr.f32.gmra.mxu0 %v64
  %v172 = vpop.f32.mrf.mxu0
  %v173 = vadd.f32 %v41, %v172
  %v174 = vpop.f32.mrf.mxu0
  %175 = vmatprep.mubr.f32.mxu0 0.0
  %176 = vmatmul.mubr.f32.gmra.mxu0 %v67
  %v177 = vpop.f32.mrf.mxu0
  %v178 = vadd.f32 %v42, %v177
  %v179 = vpop.f32.mrf.mxu0
  %180 = vmatprep.mubr.f32.mxu0 0.0
  %181 = vmatmul.mubr.f32.gmra.mxu0 %v70
  %v182 = vpop.f32.mrf.mxu0
  %v183 = vadd.f32 %v43, %v182
  %v184 = vpop.f32.mrf.mxu0
  %185 = vmatprep.mubr.f32.mxu0 0.0
  %186 = vmatmul.mubr.f32.gmra.mxu0 %v73
  %v187 = vpop.f32.mrf.mxu0
  %v188 = vadd.f32 %v44, %v187
  %v189 = vpop.f32.mrf.mxu0
  %190 = vmatprep.mubr.f32.mxu0 0.0
  %191 = vmatmul.mubr.f32.gmra.mxu0 %v76
  %v192 = vpop.f32.mrf.mxu0
  %v193 = vadd.f32 %v45, %v192
  %v194 = vpop.f32.mrf.mxu0
  %195 = vmatprep.mubr.f32.mxu0 0.0
  %196 = vmatmul.mubr.f32.gmra.mxu0 %v79
  %v197 = vpop.f32.mrf.mxu0
  %v198 = vadd.f32 %v46, %v197
  %v199 = vpop.f32.mrf.mxu0
  %200 = vdwg.mxu0
  %vm201 = vcmask 64512
  %202 = vst.msk [vmem:[%s3] sm:$0xff] %vm201, %v148
  %203 = vst.msk [vmem:[%s3 + $0x8] sm:$0xff] %vm201, %v153
  %204 = vst.msk [vmem:[%s3 + $0x10] sm:$0xff] %vm201, %v158
  %205 = vst.msk [vmem:[%s3 + $0x18] sm:$0xff] %vm201, %v163
  %206 = vst.msk [vmem:[%s3 + $0x20] sm:$0xff] %vm201, %v168
  %207 = vst.msk [vmem:[%s3 + $0x28] sm:$0xff] %vm201, %v173
  %208 = vst.msk [vmem:[%s3 + $0x30] sm:$0xff] %vm201, %v178
  %209 = vst.msk [vmem:[%s3 + $0x38] sm:$0xff] %vm201, %v183
  %210 = vst.msk [vmem:[%s3 + $0x40] sm:$0xff] %vm201, %v188
  %211 = vst.msk [vmem:[%s3 + $0x48] sm:$0xff] %vm201, %v193
  %212 = vst.msk [vmem:[%s3 + $0x50] sm:$0xff] %vm201, %v198
  // Predicated region
  $region14: #{tpu_custom_call.1} parent=0 // pred_check
    _
  $region15: #{tpu_custom_call.1} parent=0 // pred_check_branch
    %214 = sbr.rel (0) target = $region17
  $region16: #{tpu_custom_call.1} parent=0 // pred_region
    _
  $region17: #{tpu_custom_call.1} parent=0 // pred_fallthru
    _
  // Predicated region
  $region18: #{tpu_custom_call.1} parent=0 // pred_check
    _
  $region19: #{tpu_custom_call.1} parent=0 // pred_check_branch
    %216 = sbr.rel (0) target = $region21
  $region20: #{tpu_custom_call.1} parent=0 // pred_region
    _
  $region21: #{tpu_custom_call.1} parent=0 // pred_fallthru
    _

</llo_original>
